<compile_context>
chip_gen: v6e
topology: v6e:2x2x1
jax: 0.10.0
libtpu: 0.0.40
codegen_flags: <defaults>
</compile_context>

<pallas_src>
import jax
import jax.numpy as jnp
from jax.experimental import pallas as pl
from jax.experimental.pallas import tpu as pltpu

LANE = 128
MIN_TILE = 16  # bf16-friendly sublane multiple


def _round_up(x, m):
    return ((x + m - 1) // m) * m


def critic_kernel(x_ref, w1_ref, b1_ref, w2_ref, b2_ref, w3_ref, b3_ref, o_ref):
    # Cast the streamed f32 batch tile to bf16 on the VPU (free relative to HBM).
    x = x_ref[...].astype(jnp.bfloat16)                                   # (TB, n_states)
    # Layer 1: Linear(n_states -> hidden) + ReLU  (bf16 MXU operands, f32 accumulation).
    h1 = jnp.dot(x, w1_ref[...], preferred_element_type=jnp.float32) + b1_ref[...]
    h1 = jnp.maximum(h1, 0.0)
    # Layer 2: Linear(hidden -> hidden) + ReLU.
    h2 = jnp.dot(h1.astype(jnp.bfloat16), w2_ref[...],
                 preferred_element_type=jnp.float32) + b2_ref[...]
    h2 = jnp.maximum(h2, 0.0)                                             # (TB, H) f32
    # Layer 3: value head (hidden -> 1), produced directly with batch on the lane axis:
    # (1, H) . (TB, H)^T -> (1, TB)  (NT dimension numbers; MXU is otherwise idle here).
    v = jax.lax.dot_general(w3_ref[...], h2, (((1,), (1,)), ((), ())),
                            preferred_element_type=jnp.float32)           # (1, TB) f32
    o_ref[...] = (v + b3_ref[...]).astype(o_ref.dtype)                    # lane-dense store


def prepare_params(params):
    """Pad only the hidden dim to a multiple of 128; MXU weights -> bf16; w3 -> (1, H) row."""
    w1, b1, w2, b2, w3, b3 = params
    n_states, hidden = w1.shape
    h_pad = _round_up(hidden, LANE)

    w1p = jnp.zeros((n_states, h_pad), jnp.float32).at[:, :hidden].set(w1).astype(jnp.bfloat16)
    w2p = jnp.zeros((h_pad, h_pad), jnp.float32).at[:hidden, :hidden].set(w2).astype(jnp.bfloat16)
    b1p = jnp.zeros((1, h_pad), jnp.float32).at[:, :hidden].set(b1)
    b2p = jnp.zeros((1, h_pad), jnp.float32).at[:, :hidden].set(b2)
    w3p = jnp.zeros((1, h_pad), jnp.float32).at[:, :hidden].set(w3.reshape(1, hidden))
    b3p = b3.reshape(1, 1).astype(jnp.float32)
    return (w1p, b1p, w2p, b2p, w3p, b3p)


def critic_forward(state, padded_params, *, tb=512):
    """state: [B, n_states] float32 -> value: [B, 1] float32."""
    w1p, b1p, w2p, b2p, w3p, b3p = padded_params
    B, n_states = state.shape
    assert n_states == w1p.shape[0], "state feature dim must match w1"
    h_pad = w1p.shape[1]

    # Batch tile: multiple of 16 (bf16 sublane packing). If the grid ends up with more than
    # one tile, force tb to a multiple of 128 so the lane-blocked output stays unmasked.
    tb = max(MIN_TILE, _round_up(min(tb, B), MIN_TILE))
    if tb < B:
        tb = _round_up(tb, LANE)
    b_pad = _round_up(B, tb)
    num_tiles = b_pad // tb

    # Only pad the batch axis (and only when needed); features stay at n_states, dtype stays f32.
    if b_pad != B:
        x = jnp.zeros((b_pad, n_states), jnp.float32).at[:B, :].set(state)
    else:
        x = state

    flops = 2 * b_pad * (n_states * h_pad + h_pad * h_pad + h_pad)
    bytes_accessed = (x.size * 4                       # streamed input (f32)
                      + w1p.size * 2 + w2p.size * 2    # bf16 weights (resident)
                      + (b1p.size + b2p.size + w3p.size + b3p.size) * 4
                      + b_pad * 4)                     # value writeback (4 B / row)

    resident = lambda arr: pl.BlockSpec(arr.shape, lambda i: (0, 0))  # stays in VMEM across tiles

    out_row = pl.pallas_call(
        critic_kernel,
        out_shape=jax.ShapeDtypeStruct((1, b_pad), jnp.float32),      # batch on lanes
        grid=(num_tiles,),
        in_specs=[
            pl.BlockSpec((tb, n_states), lambda i: (i, 0)),            # x: streamed per batch tile
            resident(w1p), resident(b1p),
            resident(w2p), resident(b2p),
            resident(w3p), resident(b3p),
        ],
        out_specs=pl.BlockSpec((1, tb), lambda i: (0, i)),
        compiler_params=pltpu.CompilerParams(dimension_semantics=("parallel",)),
        cost_estimate=pl.CostEstimate(flops=flops, transcendentals=0,
                                      bytes_accessed=bytes_accessed),
    )(x, w1p, b1p, w2p, b2p, w3p, b3p)

    return out_row[0, :B].reshape(B, 1)


def init_params(key, n_states, hidden_dim):
    """Deterministic init mimicking PyTorch Linear's U(-1/sqrt(fan_in), 1/sqrt(fan_in)).
    Weights stored as [in_features, out_features] so the kernel computes x @ W + b."""
    ks = jax.random.split(key, 6)

    def lin(kw, kb, fan_in, fan_out):
        bound = 1.0 / jnp.sqrt(jnp.float32(fan_in))
        w = jax.random.uniform(kw, (fan_in, fan_out), jnp.float32, -bound, bound)
        b = jax.random.uniform(kb, (1, fan_out), jnp.float32, -bound, bound)
        return w, b

    w1, b1 = lin(ks[0], ks[1], n_states, hidden_dim)
    w2, b2 = lin(ks[2], ks[3], hidden_dim, hidden_dim)
    w3, b3 = lin(ks[4], ks[5], hidden_dim, 1)
    return (w1, b1, w2, b2, w3, b3)


def critic_ref(state, params):
    """Pure-JAX f32 reference for correctness check."""
    w1, b1, w2, b2, w3, b3 = params
    h1 = jnp.maximum(state @ w1 + b1, 0.0)
    h2 = jnp.maximum(h1 @ w2 + b2, 0.0)
    return h2 @ w3 + b3


if __name__ == "__main__":
    key = jax.random.PRNGKey(0)
    k_params, k_state = jax.random.split(key)

    B, n_states, hidden_dim = 8, 16, 32
    params = init_params(k_params, n_states, hidden_dim)
    state = jax.random.normal(k_state, (B, n_states), jnp.float32)

    padded_params = prepare_params(params)
    value = critic_forward(state, padded_params)
    value = jax.block_until_ready(value)

    ref = critic_ref(state, params)
    assert value.shape == (B, 1), value.shape
    # bf16 MXU operands (f32 accumulation) -> compare with bf16-level tolerance.
    assert jnp.allclose(value, ref, atol=2e-2, rtol=2e-2), float(jnp.max(jnp.abs(value - ref)))

    print("KERNEL_OK")
</pallas_src>

<mosaic_0001>
module attributes {stable_mosaic.version = 11 : i64} {
  func.func @critic_kernel(%arg0: i32, %arg1: memref<16x16xf32, #tpu.memory_space<vmem>>, %arg2: memref<16x128xbf16, #tpu.memory_space<vmem>>, %arg3: memref<1x128xf32, #tpu.memory_space<vmem>>, %arg4: memref<128x128xbf16, #tpu.memory_space<vmem>>, %arg5: memref<1x128xf32, #tpu.memory_space<vmem>>, %arg6: memref<1x128xf32, #tpu.memory_space<vmem>>, %arg7: memref<1x1xf32, #tpu.memory_space<vmem>>, %arg8: memref<1x16xf32, #tpu.memory_space<vmem>>) attributes {dimension_semantics = [#tpu.dimension_semantics<parallel>], iteration_bounds = array<i64: 1>, scalar_prefetch = 0 : i64, scratch_operands = 0 : i64, tpu.core_type = #tpu.core_type<tc>, window_params = [{transform_indices = @transform_0, window_bounds = array<i64: 16, 16>}, {pipeline_mode = #tpu.pipeline_mode<synchronous>, transform_indices = @transform_1, window_bounds = array<i64: 16, 128>}, {pipeline_mode = #tpu.pipeline_mode<synchronous>, transform_indices = @transform_2, window_bounds = array<i64: 1, 128>}, {pipeline_mode = #tpu.pipeline_mode<synchronous>, transform_indices = @transform_3, window_bounds = array<i64: 128, 128>}, {pipeline_mode = #tpu.pipeline_mode<synchronous>, transform_indices = @transform_4, window_bounds = array<i64: 1, 128>}, {pipeline_mode = #tpu.pipeline_mode<synchronous>, transform_indices = @transform_5, window_bounds = array<i64: 1, 128>}, {pipeline_mode = #tpu.pipeline_mode<synchronous>, transform_indices = @transform_6, window_bounds = array<i64: 1, 1>}, {transform_indices = @transform_7, window_bounds = array<i64: 1, 16>}]} {
    %c0 = arith.constant 0 : index
    %c0_0 = arith.constant 0 : index
    %0 = vector.load %arg1[%c0, %c0_0] : memref<16x16xf32, #tpu.memory_space<vmem>>, vector<16x16xf32>
    %1 = arith.truncf %0 : vector<16x16xf32> to vector<16x16xbf16>
    %c0_1 = arith.constant 0 : index
    %c0_2 = arith.constant 0 : index
    %2 = vector.load %arg2[%c0_1, %c0_2] : memref<16x128xbf16, #tpu.memory_space<vmem>>, vector<16x128xbf16>
    %cst = arith.constant dense<0.000000e+00> : vector<16x128xf32>
    %3 = tpu.matmul %1, %2, %cst {dimension_numbers = #tpu.dot_dimension_numbers<[1], [0], [0], [1], [0, 0, 1, 1], [], []>} : vector<16x16xbf16>, vector<16x128xbf16>, vector<16x128xf32> -> vector<16x128xf32>
    %c0_3 = arith.constant 0 : index
    %c0_4 = arith.constant 0 : index
    %4 = vector.load %arg3[%c0_3, %c0_4] : memref<1x128xf32, #tpu.memory_space<vmem>>, vector<1x128xf32>
    %5 = vector.broadcast %4 : vector<1x128xf32> to vector<16x128xf32>
    %6 = arith.addf %3, %5 : vector<16x128xf32>
    %cst_5 = arith.constant 0.000000e+00 : f32
    %7 = vector.broadcast %cst_5 : f32 to vector<16x128xf32>
    %8 = arith.maximumf %6, %7 : vector<16x128xf32>
    %9 = arith.truncf %8 : vector<16x128xf32> to vector<16x128xbf16>
    %c0_6 = arith.constant 0 : index
    %c0_7 = arith.constant 0 : index
    %10 = vector.load %arg4[%c0_6, %c0_7] : memref<128x128xbf16, #tpu.memory_space<vmem>>, vector<128x128xbf16>
    %cst_8 = arith.constant dense<0.000000e+00> : vector<16x128xf32>
    %11 = tpu.matmul %9, %10, %cst_8 {dimension_numbers = #tpu.dot_dimension_numbers<[1], [0], [0], [1], [0, 0, 1, 1], [], []>} : vector<16x128xbf16>, vector<128x128xbf16>, vector<16x128xf32> -> vector<16x128xf32>
    %c0_9 = arith.constant 0 : index
    %c0_10 = arith.constant 0 : index
    %12 = vector.load %arg5[%c0_9, %c0_10] : memref<1x128xf32, #tpu.memory_space<vmem>>, vector<1x128xf32>
    %13 = vector.broadcast %12 : vector<1x128xf32> to vector<16x128xf32>
    %14 = arith.addf %11, %13 : vector<16x128xf32>
    %cst_11 = arith.constant 0.000000e+00 : f32
    %15 = vector.broadcast %cst_11 : f32 to vector<16x128xf32>
    %16 = arith.maximumf %14, %15 : vector<16x128xf32>
    %c0_12 = arith.constant 0 : index
    %c0_13 = arith.constant 0 : index
    %17 = vector.load %arg6[%c0_12, %c0_13] : memref<1x128xf32, #tpu.memory_space<vmem>>, vector<1x128xf32>
    %cst_14 = arith.constant dense<0.000000e+00> : vector<1x16xf32>
    %18 = tpu.matmul %17, %16, %cst_14 {dimension_numbers = #tpu.dot_dimension_numbers<[1], [1], [0], [0], [0, 0, 1, 0], [], []>} : vector<1x128xf32>, vector<16x128xf32>, vector<1x16xf32> -> vector<1x16xf32>
    %c0_15 = arith.constant 0 : index
    %c0_16 = arith.constant 0 : index
    %19 = vector.load %arg7[%c0_15, %c0_16] : memref<1x1xf32, #tpu.memory_space<vmem>>, vector<1x1xf32>
    %20 = vector.broadcast %19 : vector<1x1xf32> to vector<1x16xf32>
    %21 = arith.addf %18, %20 : vector<1x16xf32>
    %c0_17 = arith.constant 0 : index
    %c0_18 = arith.constant 0 : index
    %22 = vector.load %arg8[%c0_17, %c0_18] : memref<1x16xf32, #tpu.memory_space<vmem>>, vector<1x16xf32>
    tpu.vector_store %arg8[%c0_17, %c0_18], %21 {strides = array<i32>} : memref<1x16xf32, #tpu.memory_space<vmem>>, vector<1x16xf32>,
    return
  }
  func.func @transform_0(%arg0: i32) -> (i32, i32) {
    %c0_i32 = arith.constant 0 : i32
    %c0_i32_0 = arith.constant 0 : i32
    return %arg0, %c0_i32 : i32, i32
  }
  func.func @transform_1(%arg0: i32) -> (i32, i32) {
    %c0_i32 = arith.constant 0 : i32
    %c0_i32_0 = arith.constant 0 : i32
    %c0_i32_1 = arith.constant 0 : i32
    return %c0_i32, %c0_i32_0 : i32, i32
  }
  func.func @transform_2(%arg0: i32) -> (i32, i32) {
    %c0_i32 = arith.constant 0 : i32
    %c0_i32_0 = arith.constant 0 : i32
    %c0_i32_1 = arith.constant 0 : i32
    return %c0_i32, %c0_i32_0 : i32, i32
  }
  func.func @transform_3(%arg0: i32) -> (i32, i32) {
    %c0_i32 = arith.constant 0 : i32
    %c0_i32_0 = arith.constant 0 : i32
    %c0_i32_1 = arith.constant 0 : i32
    return %c0_i32, %c0_i32_0 : i32, i32
  }
  func.func @transform_4(%arg0: i32) -> (i32, i32) {
    %c0_i32 = arith.constant 0 : i32
    %c0_i32_0 = arith.constant 0 : i32
    %c0_i32_1 = arith.constant 0 : i32
    return %c0_i32, %c0_i32_0 : i32, i32
  }
  func.func @transform_5(%arg0: i32) -> (i32, i32) {
    %c0_i32 = arith.constant 0 : i32
    %c0_i32_0 = arith.constant 0 : i32
    %c0_i32_1 = arith.constant 0 : i32
    return %c0_i32, %c0_i32_0 : i32, i32
  }
  func.func @transform_6(%arg0: i32) -> (i32, i32) {
    %c0_i32 = arith.constant 0 : i32
    %c0_i32_0 = arith.constant 0 : i32
    %c0_i32_1 = arith.constant 0 : i32
    return %c0_i32, %c0_i32_0 : i32, i32
  }
  func.func @transform_7(%arg0: i32) -> (i32, i32) {
    %c0_i32 = arith.constant 0 : i32
    %c0_i32_0 = arith.constant 0 : i32
    return %c0_i32, %arg0 : i32, i32
  }
}

</mosaic_0001>

<llo_original>
// kernel: tpu_custom_call.1
$region0: #{tpu_custom_call.1}
  #allocation0 [shape = 'u32[]', space=smem, size = 0x4, offset = 0x4, fixed_abs, tag = 'smem constant byte address 0x4 - core index']
  #allocation1 [shape = 'u32[144,128]{1,0:T(1,128)}', space=vmem, size = 0x12000, scoped, tag = 'internal scratch']
  #allocation2 [shape = 'f32[1,1]{1,0:T(1,128)S(1)}', space=vmem, size = 0x200, scoped, tag = 'scoped memory for tpu_custom_call.1']
  %s0 = inlined_call_operand.hbm [shape: f32[16,16], index: 0, kind: input, shape index: {}]
  %s1 = inlined_call_operand.hbm [shape: bf16[16,128], index: 1, kind: input, shape index: {}]
  %s2 = inlined_call_operand.vmem [shape: f32[1,128], index: 2, kind: input, shape index: {}]
  %s3 = inlined_call_operand.hbm [shape: bf16[128,128], index: 3, kind: input, shape index: {}]
  %s4 = inlined_call_operand.vmem [shape: f32[1,128], index: 4, kind: input, shape index: {}]
  %s5 = inlined_call_operand.vmem [shape: f32[1,128], index: 5, kind: input, shape index: {}]
  %s6 = inlined_call_operand.<no memory space> [shape: f32[1,1], index: 6, kind: input, shape index: {}]
  %s7 = inlined_call_operand.hbm [shape: f32[1,16], index: 7, kind: output, shape index: {}]
  %s8 = sld [smem:[#allocation0]]
  $region50: #{tpu_custom_call.1} parent=0
    _
  %s10 = ssub.s32 1, %s8
  %s11 = scalar_select 0, %s10, %s8
  %v12 = vstv %s6
  %13 = vst [vmem:[#allocation2] sm:$0x1] %v12
  $region1: #{tpu_custom_call.1} parent=0
    #allocation3 [shape = 'u8[8192]{0}', space=vmem, size = 0x2000, scoped, tag = 'input window, operand 0, single buffered']
    #allocation4 [shape = 's32[1]{0}', space=sflag, size = 0x4, scoped, tag = 'scoped memory for tpu_custom_call.1']
    #allocation5 [shape = 's32[1]{0}', space=sflag, size = 0x4, scoped, tag = 'scoped memory for tpu_custom_call.1']
    #allocation6 [shape = 'u8[4096]{0}', space=vmem, size = 0x1000, scoped, tag = 'input window, operand 1, single buffered']
    #allocation7 [shape = 's32[1]{0}', space=sflag, size = 0x4, scoped, tag = 'scoped memory for tpu_custom_call.1']
    #allocation8 [shape = 'u8[32768]{0}', space=vmem, size = 0x8000, scoped, tag = 'input window, operand 3, single buffered']
    #allocation9 [shape = 'u8[512]{0}', space=vmem, size = 0x400, scoped, tag = 'output window, operand 0, single buffered']
    %14 = vsyncpa [#allocation4], 0
    %15 = vsyncpa [#allocation7], 0
    %16 = vsyncpa [#allocation5], 0
    // Predicated region
    $region2: #{tpu_custom_call.1} parent=1 // pred_check
      _
    $region3: #{tpu_custom_call.1} parent=1 // pred_check_branch
      %18 = sbr.rel (0) target = $region5
    $region4: #{tpu_custom_call.1} parent=1 // pred_region
      %s20 = ssub.s32 256, 256
      %21 = vsyncadd [#allocation4], %s20
      %s22 = sshll.u32 [#allocation3], 4
      %s23 = int_to_ptr.vmem [resolvable:$true] %s22
      %28 = dma.hbm_to_vmem [thread:$0]  %s0, 256, %s23, [#allocation4], 128, 128, 8
    $region5: #{tpu_custom_call.1} parent=1 // pred_fallthru
      _
    // Predicated region
    $region6: #{tpu_custom_call.1} parent=1 // pred_check
      _
    $region7: #{tpu_custom_call.1} parent=1 // pred_check_branch
      %30 = sbr.rel (0) target = $region9
    $region8: #{tpu_custom_call.1} parent=1 // pred_region
      %s32 = ssub.s32 128, 128
      %33 = vsyncadd [#allocation7], %s32
      %s34 = sshll.u32 [#allocation6], 4
      %s35 = int_to_ptr.vmem [resolvable:$true] %s34
      %40 = dma.hbm_to_vmem [thread:$0]  %s1, 128, %s35, [#allocation7], 64, 64, 4
    $region9: #{tpu_custom_call.1} parent=1 // pred_fallthru
      _
    // Predicated region
    $region10: #{tpu_custom_call.1} parent=1 // pred_check
      _
    $region11: #{tpu_custom_call.1} parent=1 // pred_check_branch
      %42 = sbr.rel (0) target = $region13
    $region12: #{tpu_custom_call.1} parent=1 // pred_region
      _
    $region13: #{tpu_custom_call.1} parent=1 // pred_fallthru
      _
    // Predicated region
    $region14: #{tpu_custom_call.1} parent=1 // pred_check
      _
    $region15: #{tpu_custom_call.1} parent=1 // pred_check_branch
      %44 = sbr.rel (0) target = $region17
    $region16: #{tpu_custom_call.1} parent=1 // pred_region
      %s46 = ssub.s32 1024, 1024
      %47 = vsyncadd [#allocation7], %s46
      %s48 = sshll.u32 [#allocation8], 4
      %s49 = int_to_ptr.vmem [resolvable:$true] %s48
      %54 = dma.hbm_to_vmem [thread:$0]  %s3, 1024, %s49, [#allocation7], 64, 64, 4
    $region17: #{tpu_custom_call.1} parent=1 // pred_fallthru
      _
    // Predicated region
    $region18: #{tpu_custom_call.1} parent=1 // pred_check
      _
    $region19: #{tpu_custom_call.1} parent=1 // pred_check_branch
      %56 = sbr.rel (0) target = $region21
    $region20: #{tpu_custom_call.1} parent=1 // pred_region
      _
    $region21: #{tpu_custom_call.1} parent=1 // pred_fallthru
      _
    // Predicated region
    $region22: #{tpu_custom_call.1} parent=1 // pred_check
      _
    $region23: #{tpu_custom_call.1} parent=1 // pred_check_branch
      %58 = sbr.rel (0) target = $region25
    $region24: #{tpu_custom_call.1} parent=1 // pred_region
      _
    $region25: #{tpu_custom_call.1} parent=1 // pred_fallthru
      _
    // Predicated region
    $region26: #{tpu_custom_call.1} parent=1 // pred_check
      _
    $region27: #{tpu_custom_call.1} parent=1 // pred_check_branch
      %60 = sbr.rel (0) target = $region29
    $region28: #{tpu_custom_call.1} parent=1 // pred_region
      _
    $region29: #{tpu_custom_call.1} parent=1 // pred_fallthru
      _
    // Predicated region
    $region30: #{tpu_custom_call.1} parent=1 // pred_check
      _
    $region31: #{tpu_custom_call.1} parent=1 // pred_check_branch
      %62 = sbr.rel (0) target = $region33
    $region32: #{tpu_custom_call.1} parent=1 // pred_region
      %63 = dma.done [#allocation4], 256
    $region33: #{tpu_custom_call.1} parent=1 // pred_fallthru
      _
    // Predicated region
    $region34: #{tpu_custom_call.1} parent=1 // pred_check
      _
    $region35: #{tpu_custom_call.1} parent=1 // pred_check_branch
      %65 = sbr.rel (0) target = $region37
    $region36: #{tpu_custom_call.1} parent=1 // pred_region
      %66 = dma.done [#allocation7], 128
    $region37: #{tpu_custom_call.1} parent=1 // pred_fallthru
      _
    // Predicated region
    $region38: #{tpu_custom_call.1} parent=1 // pred_check
      _
    $region39: #{tpu_custom_call.1} parent=1 // pred_check_branch
      %68 = sbr.rel (0) target = $region41
    $region40: #{tpu_custom_call.1} parent=1 // pred_region
      %69 = dma.done [#allocation7], 1024
    $region41: #{tpu_custom_call.1} parent=1 // pred_fallthru
      _
    %v71 = vld [vmem:[#allocation3] sm:$0xff]
    %v72 = vld [vmem:[#allocation3 + $0x8] sm:$0xff]
    %v73 = vpack.c.bf16 %v72, %v71
    %v74 = vld [vmem:[#allocation6] sm:$0xf]
    %v75 = vld [vmem:[#allocation6 + $0x4] sm:$0xf]
    %v76 = vld [vmem:[%s2] sm:$0x1]
    %v78 = vlaneseq
    %v79 = vshrl.u32 %v78, 7
    %v80 = vsub.s32 0, %v79
    %v81 = vrot.slane %v76, %v80
    %v85 = vunpack.c.l.b16 %v74
    %v86 = vunpack.c.l.b16 %v75
    %v87 = vpack.c.b16 %v86, %v85
    %vm89 = vcmask 130048
    %v91 = vsel %vm89, %v73, 0
    %93 = vmatprep.subr.bf16.mxu0 0
    %94 = vmatpush1.bf16.msra.mxu0 0
    %95 = vmatprep.subr.bf16.mxu0 0
    %96 = vmatpush1.bf16.msra.mxu0 0
    %97 = vmatprep.subr.bf16.mxu0 0
    %98 = vmatpush1.bf16.msra.mxu0 0
    %99 = vmatprep.subr.bf16.mxu0 0
    %100 = vmatpush1.bf16.msra.mxu0 0
    %101 = vmatprep.subr.bf16.mxu0 0
    %102 = vmatpush1.bf16.msra.mxu0 0
    %103 = vmatprep.subr.bf16.mxu0 0
    %104 = vmatpush1.bf16.msra.mxu0 0
    %105 = vmatprep.subr.bf16.mxu0 0
    %106 = vmatpush1.bf16.msra.mxu0 0
    %107 = vmatprep.subr.bf16.mxu0 0
    %108 = vmatpush1.bf16.msra.mxu0 %v87
    %109 = vmatprep.subr.bf16.mxu0 0
    %110 = vmatpush2.bf16.msra.mxu0 0
    %111 = vmatprep.subr.bf16.mxu0 0
    %112 = vmatpush2.bf16.msra.mxu0 0
    %113 = vmatprep.subr.bf16.mxu0 0
    %114 = vmatpush2.bf16.msra.mxu0 0
    %115 = vmatprep.subr.bf16.mxu0 0
    %116 = vmatpush2.bf16.msra.mxu0 0
    %117 = vmatprep.subr.bf16.mxu0 0
    %118 = vmatpush2.bf16.msra.mxu0 0
    %119 = vmatprep.subr.bf16.mxu0 0
    %120 = vmatpush2.bf16.msra.mxu0 0
    %121 = vmatprep.subr.bf16.mxu0 0
    %122 = vmatpush2.bf16.msra.mxu0 0
    %123 = vmatprep.subr.bf16.mxu0 0
    %124 = vmatpush2.bf16.msra.mxu0 0
    %125 = vmatprep.mubr.bf16.mxu0 0
    %126 = vmatmul.mubr.bf16.gmra.mxu0 %v91
    %v127 = vpop.f32.mrf.mxu0
    %v128 = vadd.f32 %v81, %v127
    %v129 = vpop.f32.mrf.mxu0
    %v130 = vpop.f32.mrf.mxu0
    %v131 = vadd.f32 %v81, %v130
    %v132 = vpop.f32.mrf.mxu0
    %133 = vdwg.mxu0
    %v134 = vmax.f32 %v128, 0.0
    %v135 = vmax.f32 %v131, 0.0
    %v136 = vpack.c.bf16 %v135, %v134
    %v137 = vld [vmem:[#allocation8] sm:$0xf]
    %v138 = vld [vmem:[#allocation8 + $0x4] sm:$0xf]
    %v139 = vld [vmem:[#allocation8 + $0x8] sm:$0xf]
    %v140 = vld [vmem:[#allocation8 + $0xc] sm:$0xf]
    %v141 = vld [vmem:[#allocation8 + $0x10] sm:$0xf]
    %v142 = vld [vmem:[#allocation8 + $0x14] sm:$0xf]
    %v143 = vld [vmem:[#allocation8 + $0x18] sm:$0xf]
    %v144 = vld [vmem:[#allocation8 + $0x1c] sm:$0xf]
    %v145 = vld [vmem:[#allocation8 + $0x20] sm:$0xf]
    %v146 = vld [vmem:[#allocation8 + $0x24] sm:$0xf]
    %v147 = vld [vmem:[#allocation8 + $0x28] sm:$0xf]
    %v148 = vld [vmem:[#allocation8 + $0x2c] sm:$0xf]
    %v149 = vld [vmem:[#allocation8 + $0x30] sm:$0xf]
    %v150 = vld [vmem:[#allocation8 + $0x34] sm:$0xf]
    %v151 = vld [vmem:[#allocation8 + $0x38] sm:$0xf]
    %v152 = vld [vmem:[#allocation8 + $0x3c] sm:$0xf]
    %v153 = vld [vmem:[%s4] sm:$0x1]
    %v155 = vlaneseq
    %v156 = vshrl.u32 %v155, 7
    %v157 = vsub.s32 0, %v156
    %v158 = vrot.slane %v153, %v157
    %v176 = vunpack.c.l.b16 %v137
    %v177 = vunpack.c.l.b16 %v138
    %v178 = vunpack.c.l.b16 %v139
    %v179 = vunpack.c.l.b16 %v140
    %v180 = vunpack.c.l.b16 %v141
    %v181 = vunpack.c.l.b16 %v142
    %v182 = vunpack.c.l.b16 %v143
    %v183 = vunpack.c.l.b16 %v144
    %v184 = vunpack.c.l.b16 %v145
    %v185 = vunpack.c.l.b16 %v146
    %v186 = vunpack.c.l.b16 %v147
    %v187 = vunpack.c.l.b16 %v148
    %v188 = vunpack.c.l.b16 %v149
    %v189 = vunpack.c.l.b16 %v150
    %v190 = vunpack.c.l.b16 %v151
    %v191 = vunpack.c.l.b16 %v152
    %v192 = vpack.c.b16 %v177, %v176
    %v193 = vpack.c.b16 %v179, %v178
    %v194 = vpack.c.b16 %v181, %v180
    %v195 = vpack.c.b16 %v183, %v182
    %v196 = vpack.c.b16 %v185, %v184
    %v197 = vpack.c.b16 %v187, %v186
    %v198 = vpack.c.b16 %v189, %v188
    %v199 = vpack.c.b16 %v191, %v190
    %208 = vmatprep.subr.bf16.mxu0 0
    %209 = vmatpush1.bf16.msra.mxu0 %v199
    %210 = vmatprep.subr.bf16.mxu0 0
    %211 = vmatpush1.bf16.msra.mxu0 %v198
    %212 = vmatprep.subr.bf16.mxu0 0
    %213 = vmatpush1.bf16.msra.mxu0 %v197
    %214 = vmatprep.subr.bf16.mxu0 0
    %215 = vmatpush1.bf16.msra.mxu0 %v196
    %216 = vmatprep.subr.bf16.mxu0 0
    %217 = vmatpush1.bf16.msra.mxu0 %v195
    %218 = vmatprep.subr.bf16.mxu0 0
    %219 = vmatpush1.bf16.msra.mxu0 %v194
    %220 = vmatprep.subr.bf16.mxu0 0
    %221 = vmatpush1.bf16.msra.mxu0 %v193
    %222 = vmatprep.subr.bf16.mxu0 0
    %223 = vmatpush1.bf16.msra.mxu0 %v192
    %224 = vmatprep.subr.bf16.mxu0 0
    %225 = vmatpush2.bf16.msra.mxu0 0
    %226 = vmatprep.subr.bf16.mxu0 0
    %227 = vmatpush2.bf16.msra.mxu0 0
    %228 = vmatprep.subr.bf16.mxu0 0
    %229 = vmatpush2.bf16.msra.mxu0 0
    %230 = vmatprep.subr.bf16.mxu0 0
    %231 = vmatpush2.bf16.msra.mxu0 0
    %232 = vmatprep.subr.bf16.mxu0 0
    %233 = vmatpush2.bf16.msra.mxu0 0
    %234 = vmatprep.subr.bf16.mxu0 0
    %235 = vmatpush2.bf16.msra.mxu0 0
    %236 = vmatprep.subr.bf16.mxu0 0
    %237 = vmatpush2.bf16.msra.mxu0 0
    %238 = vmatprep.subr.bf16.mxu0 0
    %239 = vmatpush2.bf16.msra.mxu0 0
    %240 = vmatprep.mubr.bf16.mxu0 0
    %241 = vmatmul.mubr.bf16.gmra.mxu0 %v136
    %v242 = vpop.f32.mrf.mxu0
    %v243 = vadd.f32 %v158, %v242
    %v244 = vpop.f32.mrf.mxu0
    %v245 = vpop.f32.mrf.mxu0
    %v246 = vadd.f32 %v158, %v245
    %v247 = vpop.f32.mrf.mxu0
    %248 = vdwg.mxu0
    %v249 = vmax.f32 %v243, 0.0
    %v250 = vmax.f32 %v246, 0.0
    %v251 = vld [vmem:[%s5] sm:$0x1]
    %v252 = vld [vmem:[#allocation2] sm:$0x1]
    %254 = vset.pattern.permute.xlu0 0
    %255 = vperm.xlu0 %254, %v252
    %v256 = vpop.permute.xlu0 %255
    %v258 = vlaneseq
    %v259 = vshrl.u32 %v258, 7
    %v260 = vsub.s32 0, %v259
    %v261 = vrot.slane %v256, %v260
    %262 = vmatprep.subr.mxu0 0.0
    %263 = vmatpush1.xpose.msra.mxu0 0.0
    %264 = vmatprep.subr.mxu0 0.0
    %265 = vmatpush1.xpose.msra.mxu0 0.0
    %266 = vmatprep.subr.mxu0 0.0
    %267 = vmatpush1.xpose.msra.mxu0 0.0
    %268 = vmatprep.subr.mxu0 0.0
    %269 = vmatpush1.xpose.msra.mxu0 0.0
    %270 = vmatprep.subr.mxu0 0.0
    %271 = vmatpush1.xpose.msra.mxu0 0.0
    %272 = vmatprep.subr.mxu0 0.0
    %273 = vmatpush1.xpose.msra.mxu0 0.0
    %274 = vmatprep.subr.mxu0 0.0
    %275 = vmatpush1.xpose.msra.mxu0 0.0
    %276 = vmatprep.subr.mxu0 0.0
    %277 = vmatpush1.xpose.msra.mxu0 0.0
    %278 = vmatprep.subr.mxu0 0.0
    %279 = vmatpush1.xpose.msra.mxu0 0.0
    %280 = vmatprep.subr.mxu0 0.0
    %281 = vmatpush1.xpose.msra.mxu0 0.0
    %282 = vmatprep.subr.mxu0 0.0
    %283 = vmatpush1.xpose.msra.mxu0 0.0
    %284 = vmatprep.subr.mxu0 0.0
    %285 = vmatpush1.xpose.msra.mxu0 0.0
    %286 = vmatprep.subr.mxu0 0.0
    %287 = vmatpush1.xpose.msra.mxu0 0.0
    %288 = vmatprep.subr.mxu0 0.0
    %289 = vmatpush1.xpose.msra.mxu0 0.0
    %290 = vmatprep.subr.mxu0 0.0
    %291 = vmatpush1.xpose.msra.mxu0 %v250
    %292 = vmatprep.subr.mxu0 0.0
    %293 = vmatpush1.xpose.msra.mxu0 %v249
    %294 = vmatprep.subr.mxu0 0.0
    %295 = vmatpush2.xpose.msra.mxu0 0.0
    %296 = vmatprep.subr.mxu0 0.0
    %297 = vmatpush2.xpose.msra.mxu0 0.0
    %298 = vmatprep.subr.mxu0 0.0
    %299 = vmatpush2.xpose.msra.mxu0 0.0
    %300 = vmatprep.subr.mxu0 0.0
    %301 = vmatpush2.xpose.msra.mxu0 0.0
    %302 = vmatprep.subr.mxu0 0.0
    %303 = vmatpush2.xpose.msra.mxu0 0.0
    %304 = vmatprep.subr.mxu0 0.0
    %305 = vmatpush2.xpose.msra.mxu0 0.0
    %306 = vmatprep.subr.mxu0 0.0
    %307 = vmatpush2.xpose.msra.mxu0 0.0
    %308 = vmatprep.subr.mxu0 0.0
    %309 = vmatpush2.xpose.msra.mxu0 0.0
    %310 = vmatprep.subr.mxu0 0.0
    %311 = vmatpush2.xpose.msra.mxu0 0.0
    %312 = vmatprep.subr.mxu0 0.0
    %313 = vmatpush2.xpose.msra.mxu0 0.0
    %314 = vmatprep.subr.mxu0 0.0
    %315 = vmatpush2.xpose.msra.mxu0 0.0
    %316 = vmatprep.subr.mxu0 0.0
    %317 = vmatpush2.xpose.msra.mxu0 0.0
    %318 = vmatprep.subr.mxu0 0.0
    %319 = vmatpush2.xpose.msra.mxu0 0.0
    %320 = vmatprep.subr.mxu0 0.0
    %321 = vmatpush2.xpose.msra.mxu0 0.0
    %322 = vmatprep.subr.mxu0 0.0
    %323 = vmatpush2.xpose.msra.mxu0 0.0
    %324 = vmatprep.subr.mxu0 0.0
    %325 = vmatpush2.xpose.msra.mxu0 0.0
    %326 = vmatprep.mubr.f32.mxu0 0.0
    %327 = vmatmul.mubr.f32.gmra.mxu0 %v251
    %v328 = vpop.f32.mrf.mxu0
    %v329 = vadd.f32 %v261, %v328
    %v330 = vpop.f32.mrf.mxu0
    %331 = vdwg.mxu0
    %vm332 = vcmask 122880
    %333 = vst.msk [vmem:[#allocation9] sm:$0x1] %vm332, %v329
    // Predicated region
    $region42: #{tpu_custom_call.1} parent=1 // pred_check
      _
    $region43: #{tpu_custom_call.1} parent=1 // pred_check_branch
      %335 = sbr.rel (0) target = $region45
    $region44: #{tpu_custom_call.1} parent=1 // pred_region
      %s337 = ssub.s32 16, 16
      %338 = vsyncadd [#allocation5], %s337
      %s340 = sshll.u32 [#allocation9], 4
      %s341 = int_to_ptr.vmem [resolvable:$true] %s340
      %343 = dma.vmem_to_hbm [thread:$0]  %s341, 16, %s7, [#allocation5]
    $region45: #{tpu_custom_call.1} parent=1 // pred_fallthru
      _
    // Predicated region
    $region46: #{tpu_custom_call.1} parent=1 // pred_check
      _
    $region47: #{tpu_custom_call.1} parent=1 // pred_check_branch
      %345 = sbr.rel (0) target = $region49
    $region48: #{tpu_custom_call.1} parent=1 // pred_region
      %346 = dma.done [#allocation5], 16
    $region49: #{tpu_custom_call.1} parent=1 // pred_fallthru
      _
    %347 = vsyncpa [#allocation4], 1
    %348 = vsyncpa [#allocation7], 1
    %349 = vsyncpa [#allocation5], 1

</llo_original>
